<compile_context>
chip_gen: v6e
topology: v6e:2x2x1
jax: 0.10.0
libtpu: 0.0.40
codegen_flags: <defaults>
</compile_context>

<pallas_src>
import functools

import jax
import jax.numpy as jnp
from jax import lax
from jax.experimental import pallas as pl
from jax.experimental.pallas import tpu as pltpu


def _round_up(x, m):
    return ((x + m - 1) // m) * m


# ----------------------------------------------------------------------------
# Pallas kernel: full forward pass, 5 fused matmuls on lane-aligned slabs.
# ----------------------------------------------------------------------------
def diffusion_policy_kernel(x_ref, w0_ref, w1_ref, w2_ref, w3_ref, w4_ref,
                            b_ref, out_ref, *, hidden_dim):
    H = hidden_dim
    f32 = jnp.float32

    x = x_ref[...]                                    # (blk, OP): [obs | t | act | 0]

    # --- stage 1: block-diag(fc1, time_embed[0], I_act) ---------------------
    h = jnp.dot(x, w0_ref[...], preferred_element_type=f32)
    h = h + b_ref[0:1, :w0_ref.shape[1]]
    lane = lax.broadcasted_iota(jnp.int32, h.shape, 1)
    relu_m = lane < H                                 # fc1 lanes
    silu_m = jnp.logical_and(lane >= H, lane < 2 * H)  # time_embed[0] lanes
    h = jnp.where(relu_m, jnp.maximum(h, 0.0),
                  jnp.where(silu_m, h * jax.nn.sigmoid(h), h))   # act lanes: identity

    # --- stage 2: block-diag(fc2, time_embed[2], I_act) ---------------------
    h = jnp.dot(h, w1_ref[...], preferred_element_type=f32)
    h = h + b_ref[1:2, :w1_ref.shape[1]]
    lane = lax.broadcasted_iota(jnp.int32, h.shape, 1)
    h = jnp.where(lane < H, jnp.maximum(h, 0.0), h)   # relu(fc2); t_emb/act identity

    # --- stage 3: fc_noise1 on cat([obs_feat, t_emb, act]) ------------------
    h = jnp.dot(h, w2_ref[...], preferred_element_type=f32)
    h = jnp.maximum(h + b_ref[2:3, :w2_ref.shape[1]], 0.0)

    # --- stage 4: fc_noise2 --------------------------------------------------
    h = jnp.dot(h, w3_ref[...], preferred_element_type=f32)
    h = jnp.maximum(h + b_ref[3:4, :w3_ref.shape[1]], 0.0)

    # --- stage 5: fc_noise_out (lane-dense store; real output lanes [0, A)) --
    out_ref[...] = (jnp.dot(h, w4_ref[...], preferred_element_type=f32)
                    + b_ref[4:5, :w4_ref.shape[1]])


# ----------------------------------------------------------------------------
# Parameter packing: per-layer params -> 5 lane-padded fused weights + 1 bias slab.
# ----------------------------------------------------------------------------
def pack_params(params, obs_dim, action_dim, hidden_dim):
    O, A, H = obs_dim, action_dim, hidden_dim
    OP = max(128, _round_up(O + 1 + A, 128))       # input slab lanes
    CAT = max(128, _round_up(2 * H + A, 128))      # [obs_feat | t_emb | act] lanes
    HP = max(128, _round_up(H, 128))               # hidden lanes
    OUT = max(128, _round_up(A, 128))              # output slab lanes
    eye = jnp.eye(A, dtype=jnp.float32)

    # stage 1: block-diag(fc1, time_embed[0], I_act)
    w0 = jnp.zeros((OP, CAT), jnp.float32)
    w0 = w0.at[:O, :H].set(params["w1"])
    w0 = w0.at[O:O + 1, H:2 * H].set(params["tw1"])
    w0 = w0.at[O + 1:O + 1 + A, 2 * H:2 * H + A].set(eye)

    # stage 2: block-diag(fc2, time_embed[2], I_act)
    w1 = jnp.zeros((CAT, CAT), jnp.float32)
    w1 = w1.at[:H, :H].set(params["w2"])
    w1 = w1.at[H:2 * H, H:2 * H].set(params["tw2"])
    w1 = w1.at[2 * H:2 * H + A, 2 * H:2 * H + A].set(eye)

    # stage 3: fc_noise1 (rows ordered as the concat: obs_feat | t_emb | act)
    w2 = jnp.zeros((CAT, HP), jnp.float32)
    w2 = w2.at[:2 * H + A, :H].set(params["wn1"])

    # stage 4: fc_noise2
    w3 = jnp.zeros((HP, HP), jnp.float32)
    w3 = w3.at[:H, :H].set(params["wn2"])

    # stage 5: fc_noise_out
    w4 = jnp.zeros((HP, OUT), jnp.float32)
    w4 = w4.at[:H, :A].set(params["wout"])

    b = jnp.zeros((8, CAT), jnp.float32)           # CAT >= HP and CAT >= OUT
    b = b.at[0, :H].set(params["b1"][0])
    b = b.at[0, H:2 * H].set(params["tb1"][0])
    b = b.at[1, :H].set(params["b2"][0])
    b = b.at[1, H:2 * H].set(params["tb2"][0])
    b = b.at[2, :H].set(params["bn1"][0])
    b = b.at[3, :H].set(params["bn2"][0])
    b = b.at[4, :A].set(params["bout"][0])

    return {"w0": w0, "w1": w1, "w2": w2, "w3": w3, "w4": w4, "b": b}


# ----------------------------------------------------------------------------
# Wrapper: batch grid (parallel), resident weights, lane-dense output.
# ----------------------------------------------------------------------------
def diffusion_policy_forward(obs, noisy_actions, t, packed, *,
                             obs_dim, action_dim, hidden_dim, block_b=256):
    B = obs.shape[0]
    O, A, H = obs_dim, action_dim, hidden_dim
    OP = packed["w0"].shape[0]
    OUT = packed["w4"].shape[1]

    if B <= block_b:
        blk = max(8, _round_up(B, 8))
        B_pad = blk
    else:
        B_pad = _round_up(B, block_b)
        blk = block_b
    n_blocks = B_pad // blk

    # one data slab per batch row: [obs | t | act | zeros]
    x0 = jnp.zeros((B_pad, OP), jnp.float32)
    x0 = x0.at[:B, :O].set(obs.astype(jnp.float32))
    x0 = x0.at[:B, O].set(t.astype(jnp.float32))
    x0 = x0.at[:B, O + 1:O + 1 + A].set(noisy_actions.astype(jnp.float32))

    w0, w1, w2, w3, w4, b = (packed["w0"], packed["w1"], packed["w2"],
                             packed["w3"], packed["w4"], packed["b"])

    def const_spec(a):
        # full-array block, constant block index -> stays VMEM-resident across grid
        return pl.BlockSpec(a.shape, lambda i: (0, 0))

    kernel = functools.partial(diffusion_policy_kernel, hidden_dim=H)
    grid_spec = pltpu.PrefetchScalarGridSpec(
        num_scalar_prefetch=0,
        grid=(n_blocks,),
        in_specs=[
            pl.BlockSpec((blk, OP), lambda i: (i, 0)),   # data slab
            const_spec(w0), const_spec(w1), const_spec(w2),
            const_spec(w3), const_spec(w4), const_spec(b),
        ],
        out_specs=pl.BlockSpec((blk, OUT), lambda i: (i, 0)),
    )
    out = pl.pallas_call(
        kernel,
        out_shape=jax.ShapeDtypeStruct((B_pad, OUT), jnp.float32),
        grid_spec=grid_spec,
        compiler_params=pltpu.CompilerParams(dimension_semantics=("parallel",)),
    )(x0, w0, w1, w2, w3, w4, b)
    return out[:B, :A]


# ----------------------------------------------------------------------------
# Deterministic parameter init (PyTorch-Linear-style uniform, fixed seed).
# ----------------------------------------------------------------------------
def init_params(key, obs_dim, action_dim, hidden_dim):
    def linear(key, fan_in, fan_out):
        kw, kb = jax.random.split(key)
        bound = 1.0 / jnp.sqrt(jnp.float32(fan_in))
        w = jax.random.uniform(kw, (fan_in, fan_out), jnp.float32, -bound, bound)
        b = jax.random.uniform(kb, (1, fan_out), jnp.float32, -bound, bound)
        return w, b

    keys = jax.random.split(key, 7)
    H, A, O = hidden_dim, action_dim, obs_dim
    w1, b1 = linear(keys[0], O, H)                  # fc1
    w2, b2 = linear(keys[1], H, H)                  # fc2
    tw1, tb1 = linear(keys[2], 1, H)                # time_embed[0]
    tw2, tb2 = linear(keys[3], H, H)                # time_embed[2]
    wn1, bn1 = linear(keys[4], 2 * H + A, H)        # fc_noise1
    wn2, bn2 = linear(keys[5], H, H)                # fc_noise2
    wout, bout = linear(keys[6], H, A)              # fc_noise_out
    return dict(w1=w1, b1=b1, w2=w2, b2=b2, tw1=tw1, tb1=tb1, tw2=tw2, tb2=tb2,
                wn1=wn1, bn1=bn1, wn2=wn2, bn2=bn2, wout=wout, bout=bout)


# ----------------------------------------------------------------------------
# Pure-JAX reference (mirrors the PyTorch forward exactly, with concat).
# ----------------------------------------------------------------------------
def reference_forward(obs, noisy_actions, t, params):
    hp = lax.Precision.HIGHEST
    relu = lambda x: jnp.maximum(x, 0.0)
    h = relu(jnp.dot(obs, params["w1"], precision=hp) + params["b1"])
    obs_feat = relu(jnp.dot(h, params["w2"], precision=hp) + params["b2"])
    te = jnp.dot(t[:, None], params["tw1"], precision=hp) + params["tb1"]
    te = te * jax.nn.sigmoid(te)
    t_emb = jnp.dot(te, params["tw2"], precision=hp) + params["tb2"]
    x = jnp.concatenate([obs_feat, t_emb, noisy_actions], axis=-1)
    x = relu(jnp.dot(x, params["wn1"], precision=hp) + params["bn1"])
    x = relu(jnp.dot(x, params["wn2"], precision=hp) + params["bn2"])
    return jnp.dot(x, params["wout"], precision=hp) + params["bout"]


if __name__ == "__main__":
    OBS_DIM = 17      # HalfCheetah-v4 observation dim
    ACTION_DIM = 6    # HalfCheetah-v4 action dim

    def run_case(hidden_dim, batch, key):
        k_obs, k_act, k_t, k_params = jax.random.split(key, 4)
        obs = jax.random.normal(k_obs, (batch, OBS_DIM), jnp.float32)
        noisy_actions = jax.random.normal(k_act, (batch, ACTION_DIM), jnp.float32)
        # t_scaled in [0, 1), like t.float() / n_timesteps in sample()
        t = jax.random.uniform(k_t, (batch,), jnp.float32)

        params = init_params(k_params, OBS_DIM, ACTION_DIM, hidden_dim)
        packed = pack_params(params, OBS_DIM, ACTION_DIM, hidden_dim)

        out = diffusion_policy_forward(
            obs, noisy_actions, t, packed,
            obs_dim=OBS_DIM, action_dim=ACTION_DIM, hidden_dim=hidden_dim)
        out = jax.block_until_ready(out)

        ref = reference_forward(obs, noisy_actions, t, params)
        assert out.shape == (batch, ACTION_DIM)
        assert jnp.allclose(out, ref, atol=2e-4, rtol=2e-4), \
            f"mismatch vs reference (hidden_dim={hidden_dim})"

    key = jax.random.PRNGKey(0)
    k_small, k_default = jax.random.split(key)
    run_case(hidden_dim=32, batch=8, key=k_small)       # small smoke config
    run_case(hidden_dim=256, batch=64, key=k_default)   # module default hidden_dim

    print("KERNEL_OK")
</pallas_src>

<mosaic_0001>
module attributes {stable_mosaic.version = 11 : i64} {
  func.func @diffusion_policy_kernel(%arg0: i32, %arg1: memref<8x128xf32, #tpu.memory_space<vmem>>, %arg2: memref<128x128xf32, #tpu.memory_space<vmem>>, %arg3: memref<128x128xf32, #tpu.memory_space<vmem>>, %arg4: memref<128x128xf32, #tpu.memory_space<vmem>>, %arg5: memref<128x128xf32, #tpu.memory_space<vmem>>, %arg6: memref<128x128xf32, #tpu.memory_space<vmem>>, %arg7: memref<8x128xf32, #tpu.memory_space<vmem>>, %arg8: memref<8x128xf32, #tpu.memory_space<vmem>>) attributes {dimension_semantics = [#tpu.dimension_semantics<parallel>], iteration_bounds = array<i64: 1>, scalar_prefetch = 0 : i64, scratch_operands = 0 : i64, tpu.core_type = #tpu.core_type<tc>, window_params = [{transform_indices = @transform_0, window_bounds = array<i64: 8, 128>}, {pipeline_mode = #tpu.pipeline_mode<synchronous>, transform_indices = @transform_1, window_bounds = array<i64: 128, 128>}, {pipeline_mode = #tpu.pipeline_mode<synchronous>, transform_indices = @transform_2, window_bounds = array<i64: 128, 128>}, {pipeline_mode = #tpu.pipeline_mode<synchronous>, transform_indices = @transform_3, window_bounds = array<i64: 128, 128>}, {pipeline_mode = #tpu.pipeline_mode<synchronous>, transform_indices = @transform_4, window_bounds = array<i64: 128, 128>}, {pipeline_mode = #tpu.pipeline_mode<synchronous>, transform_indices = @transform_5, window_bounds = array<i64: 128, 128>}, {pipeline_mode = #tpu.pipeline_mode<synchronous>, transform_indices = @transform_6, window_bounds = array<i64: 8, 128>}, {transform_indices = @transform_7, window_bounds = array<i64: 8, 128>}]} {
    %c0 = arith.constant 0 : index
    %c0_0 = arith.constant 0 : index
    %0 = vector.load %arg1[%c0, %c0_0] : memref<8x128xf32, #tpu.memory_space<vmem>>, vector<8x128xf32>
    %c0_1 = arith.constant 0 : index
    %c0_2 = arith.constant 0 : index
    %1 = vector.load %arg2[%c0_1, %c0_2] : memref<128x128xf32, #tpu.memory_space<vmem>>, vector<128x128xf32>
    %cst = arith.constant dense<0.000000e+00> : vector<8x128xf32>
    %2 = tpu.matmul %0, %1, %cst {dimension_numbers = #tpu.dot_dimension_numbers<[1], [0], [0], [1], [0, 0, 1, 1], [], []>} : vector<8x128xf32>, vector<128x128xf32>, vector<8x128xf32> -> vector<8x128xf32>
    %c0_3 = arith.constant 0 : index
    %c0_4 = arith.constant 0 : index
    %3 = vector.load %arg7[%c0_3, %c0_4] : memref<8x128xf32, #tpu.memory_space<vmem>>, vector<1x128xf32>
    %4 = vector.broadcast %3 : vector<1x128xf32> to vector<8x128xf32>
    %5 = arith.addf %2, %4 : vector<8x128xf32>
    %6 = tpu.iota {dimensions = array<i32: 1>} : vector<8x128xi32>
    %c32_i32 = arith.constant 32 : i32
    %7 = vector.broadcast %c32_i32 : i32 to vector<8x128xi32>
    %8 = arith.cmpi slt, %6, %7 : vector<8x128xi32>
    %c32_i32_5 = arith.constant 32 : i32
    %9 = vector.broadcast %c32_i32_5 : i32 to vector<8x128xi32>
    %10 = arith.cmpi sge, %6, %9 : vector<8x128xi32>
    %c64_i32 = arith.constant 64 : i32
    %11 = vector.broadcast %c64_i32 : i32 to vector<8x128xi32>
    %12 = arith.cmpi slt, %6, %11 : vector<8x128xi32>
    %13 = arith.andi %10, %12 : vector<8x128xi1>
    %cst_6 = arith.constant 0.000000e+00 : f32
    %14 = vector.broadcast %cst_6 : f32 to vector<8x128xf32>
    %15 = arith.maximumf %5, %14 : vector<8x128xf32>
    %16 = arith.negf %5 : vector<8x128xf32>
    %17 = math.exp %16 : vector<8x128xf32>
    %cst_7 = arith.constant 1.000000e+00 : f32
    %18 = vector.broadcast %cst_7 : f32 to vector<8x128xf32>
    %19 = arith.addf %18, %17 : vector<8x128xf32>
    %20 = arith.divf %18, %19 : vector<8x128xf32>
    %21 = arith.mulf %5, %20 : vector<8x128xf32>
    %22 = arith.select %13, %21, %5 : vector<8x128xi1>, vector<8x128xf32>
    %23 = arith.select %8, %15, %22 : vector<8x128xi1>, vector<8x128xf32>
    %c0_8 = arith.constant 0 : index
    %c0_9 = arith.constant 0 : index
    %24 = vector.load %arg3[%c0_8, %c0_9] : memref<128x128xf32, #tpu.memory_space<vmem>>, vector<128x128xf32>
    %cst_10 = arith.constant dense<0.000000e+00> : vector<8x128xf32>
    %25 = tpu.matmul %23, %24, %cst_10 {dimension_numbers = #tpu.dot_dimension_numbers<[1], [0], [0], [1], [0, 0, 1, 1], [], []>} : vector<8x128xf32>, vector<128x128xf32>, vector<8x128xf32> -> vector<8x128xf32>
    %c1 = arith.constant 1 : index
    %c0_11 = arith.constant 0 : index
    %26 = vector.load %arg7[%c1, %c0_11] : memref<8x128xf32, #tpu.memory_space<vmem>>, vector<1x128xf32>
    %27 = vector.broadcast %26 : vector<1x128xf32> to vector<8x128xf32>
    %28 = arith.addf %25, %27 : vector<8x128xf32>
    %29 = tpu.iota {dimensions = array<i32: 1>} : vector<8x128xi32>
    %c32_i32_12 = arith.constant 32 : i32
    %30 = vector.broadcast %c32_i32_12 : i32 to vector<8x128xi32>
    %31 = arith.cmpi slt, %29, %30 : vector<8x128xi32>
    %cst_13 = arith.constant 0.000000e+00 : f32
    %32 = vector.broadcast %cst_13 : f32 to vector<8x128xf32>
    %33 = arith.maximumf %28, %32 : vector<8x128xf32>
    %34 = arith.select %31, %33, %28 : vector<8x128xi1>, vector<8x128xf32>
    %c0_14 = arith.constant 0 : index
    %c0_15 = arith.constant 0 : index
    %35 = vector.load %arg4[%c0_14, %c0_15] : memref<128x128xf32, #tpu.memory_space<vmem>>, vector<128x128xf32>
    %cst_16 = arith.constant dense<0.000000e+00> : vector<8x128xf32>
    %36 = tpu.matmul %34, %35, %cst_16 {dimension_numbers = #tpu.dot_dimension_numbers<[1], [0], [0], [1], [0, 0, 1, 1], [], []>} : vector<8x128xf32>, vector<128x128xf32>, vector<8x128xf32> -> vector<8x128xf32>
    %c2 = arith.constant 2 : index
    %c0_17 = arith.constant 0 : index
    %37 = vector.load %arg7[%c2, %c0_17] : memref<8x128xf32, #tpu.memory_space<vmem>>, vector<1x128xf32>
    %38 = vector.broadcast %37 : vector<1x128xf32> to vector<8x128xf32>
    %39 = arith.addf %36, %38 : vector<8x128xf32>
    %cst_18 = arith.constant 0.000000e+00 : f32
    %40 = vector.broadcast %cst_18 : f32 to vector<8x128xf32>
    %41 = arith.maximumf %39, %40 : vector<8x128xf32>
    %c0_19 = arith.constant 0 : index
    %c0_20 = arith.constant 0 : index
    %42 = vector.load %arg5[%c0_19, %c0_20] : memref<128x128xf32, #tpu.memory_space<vmem>>, vector<128x128xf32>
    %cst_21 = arith.constant dense<0.000000e+00> : vector<8x128xf32>
    %43 = tpu.matmul %41, %42, %cst_21 {dimension_numbers = #tpu.dot_dimension_numbers<[1], [0], [0], [1], [0, 0, 1, 1], [], []>} : vector<8x128xf32>, vector<128x128xf32>, vector<8x128xf32> -> vector<8x128xf32>
    %c3 = arith.constant 3 : index
    %c0_22 = arith.constant 0 : index
    %44 = vector.load %arg7[%c3, %c0_22] : memref<8x128xf32, #tpu.memory_space<vmem>>, vector<1x128xf32>
    %45 = vector.broadcast %44 : vector<1x128xf32> to vector<8x128xf32>
    %46 = arith.addf %43, %45 : vector<8x128xf32>
    %cst_23 = arith.constant 0.000000e+00 : f32
    %47 = vector.broadcast %cst_23 : f32 to vector<8x128xf32>
    %48 = arith.maximumf %46, %47 : vector<8x128xf32>
    %c0_24 = arith.constant 0 : index
    %c0_25 = arith.constant 0 : index
    %49 = vector.load %arg6[%c0_24, %c0_25] : memref<128x128xf32, #tpu.memory_space<vmem>>, vector<128x128xf32>
    %cst_26 = arith.constant dense<0.000000e+00> : vector<8x128xf32>
    %50 = tpu.matmul %48, %49, %cst_26 {dimension_numbers = #tpu.dot_dimension_numbers<[1], [0], [0], [1], [0, 0, 1, 1], [], []>} : vector<8x128xf32>, vector<128x128xf32>, vector<8x128xf32> -> vector<8x128xf32>
    %c4 = arith.constant 4 : index
    %c0_27 = arith.constant 0 : index
    %51 = vector.load %arg7[%c4, %c0_27] : memref<8x128xf32, #tpu.memory_space<vmem>>, vector<1x128xf32>
    %52 = vector.broadcast %51 : vector<1x128xf32> to vector<8x128xf32>
    %53 = arith.addf %50, %52 : vector<8x128xf32>
    %c0_28 = arith.constant 0 : index
    %c0_29 = arith.constant 0 : index
    %54 = vector.load %arg8[%c0_28, %c0_29] : memref<8x128xf32, #tpu.memory_space<vmem>>, vector<8x128xf32>
    tpu.vector_store %arg8[%c0_28, %c0_29], %53 {strides = array<i32>} : memref<8x128xf32, #tpu.memory_space<vmem>>, vector<8x128xf32>,
    return
  }
  func.func @transform_0(%arg0: i32) -> (i32, i32) {
    %c0_i32 = arith.constant 0 : i32
    %c0_i32_0 = arith.constant 0 : i32
    return %arg0, %c0_i32 : i32, i32
  }
  func.func @transform_1(%arg0: i32) -> (i32, i32) {
    %c0_i32 = arith.constant 0 : i32
    %c0_i32_0 = arith.constant 0 : i32
    %c0_i32_1 = arith.constant 0 : i32
    return %c0_i32, %c0_i32_0 : i32, i32
  }
  func.func @transform_2(%arg0: i32) -> (i32, i32) {
    %c0_i32 = arith.constant 0 : i32
    %c0_i32_0 = arith.constant 0 : i32
    %c0_i32_1 = arith.constant 0 : i32
    return %c0_i32, %c0_i32_0 : i32, i32
  }
  func.func @transform_3(%arg0: i32) -> (i32, i32) {
    %c0_i32 = arith.constant 0 : i32
    %c0_i32_0 = arith.constant 0 : i32
    %c0_i32_1 = arith.constant 0 : i32
    return %c0_i32, %c0_i32_0 : i32, i32
  }
  func.func @transform_4(%arg0: i32) -> (i32, i32) {
    %c0_i32 = arith.constant 0 : i32
    %c0_i32_0 = arith.constant 0 : i32
    %c0_i32_1 = arith.constant 0 : i32
    return %c0_i32, %c0_i32_0 : i32, i32
  }
  func.func @transform_5(%arg0: i32) -> (i32, i32) {
    %c0_i32 = arith.constant 0 : i32
    %c0_i32_0 = arith.constant 0 : i32
    %c0_i32_1 = arith.constant 0 : i32
    return %c0_i32, %c0_i32_0 : i32, i32
  }
  func.func @transform_6(%arg0: i32) -> (i32, i32) {
    %c0_i32 = arith.constant 0 : i32
    %c0_i32_0 = arith.constant 0 : i32
    %c0_i32_1 = arith.constant 0 : i32
    return %c0_i32, %c0_i32_0 : i32, i32
  }
  func.func @transform_7(%arg0: i32) -> (i32, i32) {
    %c0_i32 = arith.constant 0 : i32
    %c0_i32_0 = arith.constant 0 : i32
    return %arg0, %c0_i32 : i32, i32
  }
}

</mosaic_0001>

<llo_original>
// kernel: tpu_custom_call.1
$region0: #{tpu_custom_call.1}
  #allocation0 [shape = 'u32[]', space=smem, size = 0x4, offset = 0x4, fixed_abs, tag = 'smem constant byte address 0x4 - core index']
  #allocation1 [shape = 'u32[144,128]{1,0:T(1,128)}', space=vmem, size = 0x12000, scoped, tag = 'internal scratch']
  %s0 = inlined_call_operand.hbm [shape: f32[8,128], index: 0, kind: input, shape index: {}]
  %s1 = inlined_call_operand.hbm [shape: f32[128,128], index: 1, kind: input, shape index: {}]
  %s2 = inlined_call_operand.hbm [shape: f32[128,128], index: 2, kind: input, shape index: {}]
  %s3 = inlined_call_operand.hbm [shape: f32[128,128], index: 3, kind: input, shape index: {}]
  %s4 = inlined_call_operand.hbm [shape: f32[128,128], index: 4, kind: input, shape index: {}]
  %s5 = inlined_call_operand.hbm [shape: f32[128,128], index: 5, kind: input, shape index: {}]
  %s6 = inlined_call_operand.vmem [shape: f32[8,128], index: 6, kind: input, shape index: {}]
  %s7 = inlined_call_operand.hbm [shape: f32[8,128], index: 7, kind: output, shape index: {}]
  %s8 = sld [smem:[#allocation0]]
  $region62: #{tpu_custom_call.1} parent=0
    _
  %s10 = ssub.s32 1, %s8
  %s11 = scalar_select 0, %s10, %s8
  $region1: #{tpu_custom_call.1} parent=0
    #allocation2 [shape = 'u8[4096]{0}', space=vmem, size = 0x1000, scoped, tag = 'input window, operand 0, single buffered']
    #allocation3 [shape = 's32[1]{0}', space=sflag, size = 0x4, scoped, tag = 'scoped memory for tpu_custom_call.1']
    #allocation4 [shape = 's32[1]{0}', space=sflag, size = 0x4, scoped, tag = 'scoped memory for tpu_custom_call.1']
    #allocation5 [shape = 'u8[65536]{0}', space=vmem, size = 0x10000, scoped, tag = 'input window, operand 1, single buffered']
    #allocation6 [shape = 's32[1]{0}', space=sflag, size = 0x4, scoped, tag = 'scoped memory for tpu_custom_call.1']
    #allocation7 [shape = 'u8[65536]{0}', space=vmem, size = 0x10000, scoped, tag = 'input window, operand 2, single buffered']
    #allocation8 [shape = 'u8[65536]{0}', space=vmem, size = 0x10000, scoped, tag = 'input window, operand 3, single buffered']
    #allocation9 [shape = 's32[1]{0}', space=sflag, size = 0x4, scoped, tag = 'scoped memory for tpu_custom_call.1']
    #allocation10 [shape = 'u8[65536]{0}', space=vmem, size = 0x10000, scoped, tag = 'input window, operand 4, single buffered']
    #allocation11 [shape = 'u8[65536]{0}', space=vmem, size = 0x10000, scoped, tag = 'input window, operand 5, single buffered']
    #allocation12 [shape = 's32[1]{0}', space=sflag, size = 0x4, scoped, tag = 'scoped memory for tpu_custom_call.1']
    #allocation13 [shape = 'u8[4096]{0}', space=vmem, size = 0x1000, scoped, tag = 'output window, operand 0, single buffered']
    %12 = vsyncpa [#allocation3], 0
    %13 = vsyncpa [#allocation6], 0
    %14 = vsyncpa [#allocation9], 0
    %15 = vsyncpa [#allocation12], 0
    %16 = vsyncpa [#allocation4], 0
    // Predicated region
    $region2: #{tpu_custom_call.1} parent=1 // pred_check
      _
    $region3: #{tpu_custom_call.1} parent=1 // pred_check_branch
      %18 = sbr.rel (0) target = $region5
    $region4: #{tpu_custom_call.1} parent=1 // pred_region
      %s20 = ssub.s32 128, 128
      %21 = vsyncadd [#allocation3], %s20
      %s23 = sshll.u32 [#allocation2], 4
      %s24 = int_to_ptr.vmem [resolvable:$true] %s23
      %26 = dma.hbm_to_vmem [thread:$0]  %s0, 128, %s24, [#allocation3]
    $region5: #{tpu_custom_call.1} parent=1 // pred_fallthru
      _
    // Predicated region
    $region6: #{tpu_custom_call.1} parent=1 // pred_check
      _
    $region7: #{tpu_custom_call.1} parent=1 // pred_check_branch
      %28 = sbr.rel (0) target = $region9
    $region8: #{tpu_custom_call.1} parent=1 // pred_region
      %s30 = ssub.s32 2048, 2048
      %31 = vsyncadd [#allocation6], %s30
      %s32 = sshll.u32 [#allocation5], 4
      %s33 = int_to_ptr.vmem [resolvable:$true] %s32
      %38 = dma.hbm_to_vmem [thread:$0]  %s1, 2048, %s33, [#allocation6], 128, 128, 8
    $region9: #{tpu_custom_call.1} parent=1 // pred_fallthru
      _
    // Predicated region
    $region10: #{tpu_custom_call.1} parent=1 // pred_check
      _
    $region11: #{tpu_custom_call.1} parent=1 // pred_check_branch
      %40 = sbr.rel (0) target = $region13
    $region12: #{tpu_custom_call.1} parent=1 // pred_region
      %s42 = ssub.s32 2048, 2048
      %43 = vsyncadd [#allocation6], %s42
      %s44 = sshll.u32 [#allocation7], 4
      %s45 = int_to_ptr.vmem [resolvable:$true] %s44
      %50 = dma.hbm_to_vmem [thread:$0]  %s2, 2048, %s45, [#allocation6], 128, 128, 8
    $region13: #{tpu_custom_call.1} parent=1 // pred_fallthru
      _
    // Predicated region
    $region14: #{tpu_custom_call.1} parent=1 // pred_check
      _
    $region15: #{tpu_custom_call.1} parent=1 // pred_check_branch
      %52 = sbr.rel (0) target = $region17
    $region16: #{tpu_custom_call.1} parent=1 // pred_region
      %s54 = ssub.s32 2048, 2048
      %55 = vsyncadd [#allocation9], %s54
      %s56 = sshll.u32 [#allocation8], 4
      %s57 = int_to_ptr.vmem [resolvable:$true] %s56
      %62 = dma.hbm_to_vmem [thread:$0]  %s3, 2048, %s57, [#allocation9], 128, 128, 8
    $region17: #{tpu_custom_call.1} parent=1 // pred_fallthru
      _
    // Predicated region
    $region18: #{tpu_custom_call.1} parent=1 // pred_check
      _
    $region19: #{tpu_custom_call.1} parent=1 // pred_check_branch
      %64 = sbr.rel (0) target = $region21
    $region20: #{tpu_custom_call.1} parent=1 // pred_region
      %s66 = ssub.s32 2048, 2048
      %67 = vsyncadd [#allocation9], %s66
      %s68 = sshll.u32 [#allocation10], 4
      %s69 = int_to_ptr.vmem [resolvable:$true] %s68
      %74 = dma.hbm_to_vmem [thread:$0]  %s4, 2048, %s69, [#allocation9], 128, 128, 8
    $region21: #{tpu_custom_call.1} parent=1 // pred_fallthru
      _
    // Predicated region
    $region22: #{tpu_custom_call.1} parent=1 // pred_check
      _
    $region23: #{tpu_custom_call.1} parent=1 // pred_check_branch
      %76 = sbr.rel (0) target = $region25
    $region24: #{tpu_custom_call.1} parent=1 // pred_region
      %s78 = ssub.s32 2048, 2048
      %79 = vsyncadd [#allocation12], %s78
      %s80 = sshll.u32 [#allocation11], 4
      %s81 = int_to_ptr.vmem [resolvable:$true] %s80
      %86 = dma.hbm_to_vmem [thread:$0]  %s5, 2048, %s81, [#allocation12], 128, 128, 8
    $region25: #{tpu_custom_call.1} parent=1 // pred_fallthru
      _
    // Predicated region
    $region26: #{tpu_custom_call.1} parent=1 // pred_check
      _
    $region27: #{tpu_custom_call.1} parent=1 // pred_check_branch
      %88 = sbr.rel (0) target = $region29
    $region28: #{tpu_custom_call.1} parent=1 // pred_region
      _
    $region29: #{tpu_custom_call.1} parent=1 // pred_fallthru
      _
    // Predicated region
    $region30: #{tpu_custom_call.1} parent=1 // pred_check
      _
    $region31: #{tpu_custom_call.1} parent=1 // pred_check_branch
      %90 = sbr.rel (0) target = $region33
    $region32: #{tpu_custom_call.1} parent=1 // pred_region
      %91 = dma.done [#allocation3], 128
    $region33: #{tpu_custom_call.1} parent=1 // pred_fallthru
      _
    // Predicated region
    $region34: #{tpu_custom_call.1} parent=1 // pred_check
      _
    $region35: #{tpu_custom_call.1} parent=1 // pred_check_branch
      %93 = sbr.rel (0) target = $region37
    $region36: #{tpu_custom_call.1} parent=1 // pred_region
      %94 = dma.done [#allocation6], 2048
    $region37: #{tpu_custom_call.1} parent=1 // pred_fallthru
      _
    // Predicated region
    $region38: #{tpu_custom_call.1} parent=1 // pred_check
      _
    $region39: #{tpu_custom_call.1} parent=1 // pred_check_branch
      %96 = sbr.rel (0) target = $region41
    $region40: #{tpu_custom_call.1} parent=1 // pred_region
      %97 = dma.done [#allocation6], 2048
    $region41: #{tpu_custom_call.1} parent=1 // pred_fallthru
      _
    // Predicated region
    $region42: #{tpu_custom_call.1} parent=1 // pred_check
      _
    $region43: #{tpu_custom_call.1} parent=1 // pred_check_branch
      %99 = sbr.rel (0) target = $region45
    $region44: #{tpu_custom_call.1} parent=1 // pred_region
      %100 = dma.done [#allocation9], 2048
    $region45: #{tpu_custom_call.1} parent=1 // pred_fallthru
      _
    // Predicated region
    $region46: #{tpu_custom_call.1} parent=1 // pred_check
      _
    $region47: #{tpu_custom_call.1} parent=1 // pred_check_branch
      %102 = sbr.rel (0) target = $region49
    $region48: #{tpu_custom_call.1} parent=1 // pred_region
      %103 = dma.done [#allocation9], 2048
    $region49: #{tpu_custom_call.1} parent=1 // pred_fallthru
      _
    // Predicated region
    $region50: #{tpu_custom_call.1} parent=1 // pred_check
      _
    $region51: #{tpu_custom_call.1} parent=1 // pred_check_branch
      %105 = sbr.rel (0) target = $region53
    $region52: #{tpu_custom_call.1} parent=1 // pred_region
      %106 = dma.done [#allocation12], 2048
    $region53: #{tpu_custom_call.1} parent=1 // pred_fallthru
      _
    %v107 = vld [vmem:[#allocation2] sm:$0xff]
    %v108 = vld [vmem:[#allocation5] sm:$0xff]
    %v109 = vld [vmem:[#allocation5 + $0x8] sm:$0xff]
    %v110 = vld [vmem:[#allocation5 + $0x10] sm:$0xff]
    %v111 = vld [vmem:[#allocation5 + $0x18] sm:$0xff]
    %v112 = vld [vmem:[#allocation5 + $0x20] sm:$0xff]
    %v113 = vld [vmem:[#allocation5 + $0x28] sm:$0xff]
    %v114 = vld [vmem:[#allocation5 + $0x30] sm:$0xff]
    %v115 = vld [vmem:[#allocation5 + $0x38] sm:$0xff]
    %v116 = vld [vmem:[#allocation5 + $0x40] sm:$0xff]
    %v117 = vld [vmem:[#allocation5 + $0x48] sm:$0xff]
    %v118 = vld [vmem:[#allocation5 + $0x50] sm:$0xff]
    %v119 = vld [vmem:[#allocation5 + $0x58] sm:$0xff]
    %v120 = vld [vmem:[#allocation5 + $0x60] sm:$0xff]
    %v121 = vld [vmem:[#allocation5 + $0x68] sm:$0xff]
    %v122 = vld [vmem:[#allocation5 + $0x70] sm:$0xff]
    %v123 = vld [vmem:[#allocation5 + $0x78] sm:$0xff]
    %v124 = vld [vmem:[%s6] sm:$0x1]
    %v125 = vlaneseq
    %v126 = vshrl.u32 %v125, 7
    %v127 = vsub.s32 0, %v126
    %v128 = vrot.slane %v124, %v127
    %129 = vmatprep.subr.mxu0 0.0
    %130 = vmatpush1.msra.mxu0 %v123
    %131 = vmatprep.subr.mxu0 0.0
    %132 = vmatpush1.msra.mxu0 %v122
    %133 = vmatprep.subr.mxu0 0.0
    %134 = vmatpush1.msra.mxu0 %v121
    %135 = vmatprep.subr.mxu0 0.0
    %136 = vmatpush1.msra.mxu0 %v120
    %137 = vmatprep.subr.mxu0 0.0
    %138 = vmatpush1.msra.mxu0 %v119
    %139 = vmatprep.subr.mxu0 0.0
    %140 = vmatpush1.msra.mxu0 %v118
    %141 = vmatprep.subr.mxu0 0.0
    %142 = vmatpush1.msra.mxu0 %v117
    %143 = vmatprep.subr.mxu0 0.0
    %144 = vmatpush1.msra.mxu0 %v116
    %145 = vmatprep.subr.mxu0 0.0
    %146 = vmatpush1.msra.mxu0 %v115
    %147 = vmatprep.subr.mxu0 0.0
    %148 = vmatpush1.msra.mxu0 %v114
    %149 = vmatprep.subr.mxu0 0.0
    %150 = vmatpush1.msra.mxu0 %v113
    %151 = vmatprep.subr.mxu0 0.0
    %152 = vmatpush1.msra.mxu0 %v112
    %153 = vmatprep.subr.mxu0 0.0
    %154 = vmatpush1.msra.mxu0 %v111
    %155 = vmatprep.subr.mxu0 0.0
    %156 = vmatpush1.msra.mxu0 %v110
    %157 = vmatprep.subr.mxu0 0.0
    %158 = vmatpush1.msra.mxu0 %v109
    %159 = vmatprep.subr.mxu0 0.0
    %160 = vmatpush1.msra.mxu0 %v108
    %161 = vmatprep.subr.mxu0 0.0
    %162 = vmatpush2.msra.mxu0 0.0
    %163 = vmatprep.subr.mxu0 0.0
    %164 = vmatpush2.msra.mxu0 0.0
    %165 = vmatprep.subr.mxu0 0.0
    %166 = vmatpush2.msra.mxu0 0.0
    %167 = vmatprep.subr.mxu0 0.0
    %168 = vmatpush2.msra.mxu0 0.0
    %169 = vmatprep.subr.mxu0 0.0
    %170 = vmatpush2.msra.mxu0 0.0
    %171 = vmatprep.subr.mxu0 0.0
    %172 = vmatpush2.msra.mxu0 0.0
    %173 = vmatprep.subr.mxu0 0.0
    %174 = vmatpush2.msra.mxu0 0.0
    %175 = vmatprep.subr.mxu0 0.0
    %176 = vmatpush2.msra.mxu0 0.0
    %177 = vmatprep.subr.mxu0 0.0
    %178 = vmatpush2.msra.mxu0 0.0
    %179 = vmatprep.subr.mxu0 0.0
    %180 = vmatpush2.msra.mxu0 0.0
    %181 = vmatprep.subr.mxu0 0.0
    %182 = vmatpush2.msra.mxu0 0.0
    %183 = vmatprep.subr.mxu0 0.0
    %184 = vmatpush2.msra.mxu0 0.0
    %185 = vmatprep.subr.mxu0 0.0
    %186 = vmatpush2.msra.mxu0 0.0
    %187 = vmatprep.subr.mxu0 0.0
    %188 = vmatpush2.msra.mxu0 0.0
    %189 = vmatprep.subr.mxu0 0.0
    %190 = vmatpush2.msra.mxu0 0.0
    %191 = vmatprep.subr.mxu0 0.0
    %192 = vmatpush2.msra.mxu0 0.0
    %193 = vmatprep.mubr.f32.mxu0 0.0
    %194 = vmatmul.mubr.f32.gmra.mxu0 %v107
    %v195 = vpop.f32.mrf.mxu0
    %v196 = vadd.f32 %v128, %v195
    %v197 = vpop.f32.mrf.mxu0
    %198 = vdwg.mxu0
    %v199 = vlaneseq
    %v200 = vand.u32 %v199, 127
    %vm201 = vcmp.lt.s32.totalorder %v200, 32
    %vm202 = vcmp.ge.s32.totalorder %v200, 32
    %vm203 = vcmp.lt.s32.totalorder %v200, 64
    %vm204 = vmand %vm202, %vm203
    %v205 = vmax.f32 %v196, 0.0
    %v206 = vxor.u32 %v196, 2147483648
    %v207 = vmul.f32 %v206, 1.442695
    %v208 = vpow.pop %v207
    %v209 = vadd.f32 %v208, 1.0
    %v210 = vrcp.pop %v209
    %v211 = vmul.f32 1.0, %v210
    %v212 = vmul.f32 %v196, %v211
    %v213 = vsel %vm204, %v212, %v196
    %v214 = vsel %vm201, %v205, %v213
    %v215 = vld [vmem:[#allocation7] sm:$0xff]
    %v216 = vld [vmem:[#allocation7 + $0x8] sm:$0xff]
    %v217 = vld [vmem:[#allocation7 + $0x10] sm:$0xff]
    %v218 = vld [vmem:[#allocation7 + $0x18] sm:$0xff]
    %v219 = vld [vmem:[#allocation7 + $0x20] sm:$0xff]
    %v220 = vld [vmem:[#allocation7 + $0x28] sm:$0xff]
    %v221 = vld [vmem:[#allocation7 + $0x30] sm:$0xff]
    %v222 = vld [vmem:[#allocation7 + $0x38] sm:$0xff]
    %v223 = vld [vmem:[#allocation7 + $0x40] sm:$0xff]
    %v224 = vld [vmem:[#allocation7 + $0x48] sm:$0xff]
    %v225 = vld [vmem:[#allocation7 + $0x50] sm:$0xff]
    %v226 = vld [vmem:[#allocation7 + $0x58] sm:$0xff]
    %v227 = vld [vmem:[#allocation7 + $0x60] sm:$0xff]
    %v228 = vld [vmem:[#allocation7 + $0x68] sm:$0xff]
    %v229 = vld [vmem:[#allocation7 + $0x70] sm:$0xff]
    %v230 = vld [vmem:[#allocation7 + $0x78] sm:$0xff]
    %v231 = vld [vmem:[%s6 + $0x1] sm:$0x1]
    %v232 = vlaneseq
    %v233 = vshrl.u32 %v232, 7
    %v234 = vsub.s32 0, %v233
    %v235 = vrot.slane %v231, %v234
    %236 = vmatprep.subr.mxu0 0.0
    %237 = vmatpush1.msra.mxu0 %v230
    %238 = vmatprep.subr.mxu0 0.0
    %239 = vmatpush1.msra.mxu0 %v229
    %240 = vmatprep.subr.mxu0 0.0
    %241 = vmatpush1.msra.mxu0 %v228
    %242 = vmatprep.subr.mxu0 0.0
    %243 = vmatpush1.msra.mxu0 %v227
    %244 = vmatprep.subr.mxu0 0.0
    %245 = vmatpush1.msra.mxu0 %v226
    %246 = vmatprep.subr.mxu0 0.0
    %247 = vmatpush1.msra.mxu0 %v225
    %248 = vmatprep.subr.mxu0 0.0
    %249 = vmatpush1.msra.mxu0 %v224
    %250 = vmatprep.subr.mxu0 0.0
    %251 = vmatpush1.msra.mxu0 %v223
    %252 = vmatprep.subr.mxu0 0.0
    %253 = vmatpush1.msra.mxu0 %v222
    %254 = vmatprep.subr.mxu0 0.0
    %255 = vmatpush1.msra.mxu0 %v221
    %256 = vmatprep.subr.mxu0 0.0
    %257 = vmatpush1.msra.mxu0 %v220
    %258 = vmatprep.subr.mxu0 0.0
    %259 = vmatpush1.msra.mxu0 %v219
    %260 = vmatprep.subr.mxu0 0.0
    %261 = vmatpush1.msra.mxu0 %v218
    %262 = vmatprep.subr.mxu0 0.0
    %263 = vmatpush1.msra.mxu0 %v217
    %264 = vmatprep.subr.mxu0 0.0
    %265 = vmatpush1.msra.mxu0 %v216
    %266 = vmatprep.subr.mxu0 0.0
    %267 = vmatpush1.msra.mxu0 %v215
    %268 = vmatprep.subr.mxu0 0.0
    %269 = vmatpush2.msra.mxu0 0.0
    %270 = vmatprep.subr.mxu0 0.0
    %271 = vmatpush2.msra.mxu0 0.0
    %272 = vmatprep.subr.mxu0 0.0
    %273 = vmatpush2.msra.mxu0 0.0
    %274 = vmatprep.subr.mxu0 0.0
    %275 = vmatpush2.msra.mxu0 0.0
    %276 = vmatprep.subr.mxu0 0.0
    %277 = vmatpush2.msra.mxu0 0.0
    %278 = vmatprep.subr.mxu0 0.0
    %279 = vmatpush2.msra.mxu0 0.0
    %280 = vmatprep.subr.mxu0 0.0
    %281 = vmatpush2.msra.mxu0 0.0
    %282 = vmatprep.subr.mxu0 0.0
    %283 = vmatpush2.msra.mxu0 0.0
    %284 = vmatprep.subr.mxu0 0.0
    %285 = vmatpush2.msra.mxu0 0.0
    %286 = vmatprep.subr.mxu0 0.0
    %287 = vmatpush2.msra.mxu0 0.0
    %288 = vmatprep.subr.mxu0 0.0
    %289 = vmatpush2.msra.mxu0 0.0
    %290 = vmatprep.subr.mxu0 0.0
    %291 = vmatpush2.msra.mxu0 0.0
    %292 = vmatprep.subr.mxu0 0.0
    %293 = vmatpush2.msra.mxu0 0.0
    %294 = vmatprep.subr.mxu0 0.0
    %295 = vmatpush2.msra.mxu0 0.0
    %296 = vmatprep.subr.mxu0 0.0
    %297 = vmatpush2.msra.mxu0 0.0
    %298 = vmatprep.subr.mxu0 0.0
    %299 = vmatpush2.msra.mxu0 0.0
    %300 = vmatprep.mubr.f32.mxu0 0.0
    %301 = vmatmul.mubr.f32.gmra.mxu0 %v214
    %v302 = vpop.f32.mrf.mxu0
    %v303 = vadd.f32 %v235, %v302
    %v304 = vpop.f32.mrf.mxu0
    %305 = vdwg.mxu0
    %v306 = vmax.f32 %v303, 0.0
    %v307 = vsel %vm201, %v306, %v303
    %v308 = vld [vmem:[#allocation8] sm:$0xff]
    %v309 = vld [vmem:[#allocation8 + $0x8] sm:$0xff]
    %v310 = vld [vmem:[#allocation8 + $0x10] sm:$0xff]
    %v311 = vld [vmem:[#allocation8 + $0x18] sm:$0xff]
    %v312 = vld [vmem:[#allocation8 + $0x20] sm:$0xff]
    %v313 = vld [vmem:[#allocation8 + $0x28] sm:$0xff]
    %v314 = vld [vmem:[#allocation8 + $0x30] sm:$0xff]
    %v315 = vld [vmem:[#allocation8 + $0x38] sm:$0xff]
    %v316 = vld [vmem:[#allocation8 + $0x40] sm:$0xff]
    %v317 = vld [vmem:[#allocation8 + $0x48] sm:$0xff]
    %v318 = vld [vmem:[#allocation8 + $0x50] sm:$0xff]
    %v319 = vld [vmem:[#allocation8 + $0x58] sm:$0xff]
    %v320 = vld [vmem:[#allocation8 + $0x60] sm:$0xff]
    %v321 = vld [vmem:[#allocation8 + $0x68] sm:$0xff]
    %v322 = vld [vmem:[#allocation8 + $0x70] sm:$0xff]
    %v323 = vld [vmem:[#allocation8 + $0x78] sm:$0xff]
    %v324 = vld [vmem:[%s6 + $0x2] sm:$0x1]
    %v325 = vlaneseq
    %v326 = vshrl.u32 %v325, 7
    %v327 = vsub.s32 0, %v326
    %v328 = vrot.slane %v324, %v327
    %329 = vmatprep.subr.mxu0 0.0
    %330 = vmatpush1.msra.mxu0 %v323
    %331 = vmatprep.subr.mxu0 0.0
    %332 = vmatpush1.msra.mxu0 %v322
    %333 = vmatprep.subr.mxu0 0.0
    %334 = vmatpush1.msra.mxu0 %v321
    %335 = vmatprep.subr.mxu0 0.0
    %336 = vmatpush1.msra.mxu0 %v320
    %337 = vmatprep.subr.mxu0 0.0
    %338 = vmatpush1.msra.mxu0 %v319
    %339 = vmatprep.subr.mxu0 0.0
    %340 = vmatpush1.msra.mxu0 %v318
    %341 = vmatprep.subr.mxu0 0.0
    %342 = vmatpush1.msra.mxu0 %v317
    %343 = vmatprep.subr.mxu0 0.0
    %344 = vmatpush1.msra.mxu0 %v316
    %345 = vmatprep.subr.mxu0 0.0
    %346 = vmatpush1.msra.mxu0 %v315
    %347 = vmatprep.subr.mxu0 0.0
    %348 = vmatpush1.msra.mxu0 %v314
    %349 = vmatprep.subr.mxu0 0.0
    %350 = vmatpush1.msra.mxu0 %v313
    %351 = vmatprep.subr.mxu0 0.0
    %352 = vmatpush1.msra.mxu0 %v312
    %353 = vmatprep.subr.mxu0 0.0
    %354 = vmatpush1.msra.mxu0 %v311
    %355 = vmatprep.subr.mxu0 0.0
    %356 = vmatpush1.msra.mxu0 %v310
    %357 = vmatprep.subr.mxu0 0.0
    %358 = vmatpush1.msra.mxu0 %v309
    %359 = vmatprep.subr.mxu0 0.0
    %360 = vmatpush1.msra.mxu0 %v308
    %361 = vmatprep.subr.mxu0 0.0
    %362 = vmatpush2.msra.mxu0 0.0
    %363 = vmatprep.subr.mxu0 0.0
    %364 = vmatpush2.msra.mxu0 0.0
    %365 = vmatprep.subr.mxu0 0.0
    %366 = vmatpush2.msra.mxu0 0.0
    %367 = vmatprep.subr.mxu0 0.0
    %368 = vmatpush2.msra.mxu0 0.0
    %369 = vmatprep.subr.mxu0 0.0
    %370 = vmatpush2.msra.mxu0 0.0
    %371 = vmatprep.subr.mxu0 0.0
    %372 = vmatpush2.msra.mxu0 0.0
    %373 = vmatprep.subr.mxu0 0.0
    %374 = vmatpush2.msra.mxu0 0.0
    %375 = vmatprep.subr.mxu0 0.0
    %376 = vmatpush2.msra.mxu0 0.0
    %377 = vmatprep.subr.mxu0 0.0
    %378 = vmatpush2.msra.mxu0 0.0
    %379 = vmatprep.subr.mxu0 0.0
    %380 = vmatpush2.msra.mxu0 0.0
    %381 = vmatprep.subr.mxu0 0.0
    %382 = vmatpush2.msra.mxu0 0.0
    %383 = vmatprep.subr.mxu0 0.0
    %384 = vmatpush2.msra.mxu0 0.0
    %385 = vmatprep.subr.mxu0 0.0
    %386 = vmatpush2.msra.mxu0 0.0
    %387 = vmatprep.subr.mxu0 0.0
    %388 = vmatpush2.msra.mxu0 0.0
    %389 = vmatprep.subr.mxu0 0.0
    %390 = vmatpush2.msra.mxu0 0.0
    %391 = vmatprep.subr.mxu0 0.0
    %392 = vmatpush2.msra.mxu0 0.0
    %393 = vmatprep.mubr.f32.mxu0 0.0
    %394 = vmatmul.mubr.f32.gmra.mxu0 %v307
    %v395 = vpop.f32.mrf.mxu0
    %v396 = vadd.f32 %v328, %v395
    %v397 = vpop.f32.mrf.mxu0
    %398 = vdwg.mxu0
    %v399 = vmax.f32 %v396, 0.0
    %v400 = vld [vmem:[#allocation10] sm:$0xff]
    %v401 = vld [vmem:[#allocation10 + $0x8] sm:$0xff]
    %v402 = vld [vmem:[#allocation10 + $0x10] sm:$0xff]
    %v403 = vld [vmem:[#allocation10 + $0x18] sm:$0xff]
    %v404 = vld [vmem:[#allocation10 + $0x20] sm:$0xff]
    %v405 = vld [vmem:[#allocation10 + $0x28] sm:$0xff]
    %v406 = vld [vmem:[#allocation10 + $0x30] sm:$0xff]
    %v407 = vld [vmem:[#allocation10 + $0x38] sm:$0xff]
    %v408 = vld [vmem:[#allocation10 + $0x40] sm:$0xff]
    %v409 = vld [vmem:[#allocation10 + $0x48] sm:$0xff]
    %v410 = vld [vmem:[#allocation10 + $0x50] sm:$0xff]
    %v411 = vld [vmem:[#allocation10 + $0x58] sm:$0xff]
    %v412 = vld [vmem:[#allocation10 + $0x60] sm:$0xff]
    %v413 = vld [vmem:[#allocation10 + $0x68] sm:$0xff]
    %v414 = vld [vmem:[#allocation10 + $0x70] sm:$0xff]
    %v415 = vld [vmem:[#allocation10 + $0x78] sm:$0xff]
    %v416 = vld [vmem:[%s6 + $0x3] sm:$0x1]
    %v417 = vlaneseq
    %v418 = vshrl.u32 %v417, 7
    %v419 = vsub.s32 0, %v418
    %v420 = vrot.slane %v416, %v419
    %421 = vmatprep.subr.mxu0 0.0
    %422 = vmatpush1.msra.mxu0 %v415
    %423 = vmatprep.subr.mxu0 0.0
    %424 = vmatpush1.msra.mxu0 %v414
    %425 = vmatprep.subr.mxu0 0.0
    %426 = vmatpush1.msra.mxu0 %v413
    %427 = vmatprep.subr.mxu0 0.0
    %428 = vmatpush1.msra.mxu0 %v412
    %429 = vmatprep.subr.mxu0 0.0
    %430 = vmatpush1.msra.mxu0 %v411
    %431 = vmatprep.subr.mxu0 0.0
    %432 = vmatpush1.msra.mxu0 %v410
    %433 = vmatprep.subr.mxu0 0.0
    %434 = vmatpush1.msra.mxu0 %v409
    %435 = vmatprep.subr.mxu0 0.0
    %436 = vmatpush1.msra.mxu0 %v408
    %437 = vmatprep.subr.mxu0 0.0
    %438 = vmatpush1.msra.mxu0 %v407
    %439 = vmatprep.subr.mxu0 0.0
    %440 = vmatpush1.msra.mxu0 %v406
    %441 = vmatprep.subr.mxu0 0.0
    %442 = vmatpush1.msra.mxu0 %v405
    %443 = vmatprep.subr.mxu0 0.0
    %444 = vmatpush1.msra.mxu0 %v404
    %445 = vmatprep.subr.mxu0 0.0
    %446 = vmatpush1.msra.mxu0 %v403
    %447 = vmatprep.subr.mxu0 0.0
    %448 = vmatpush1.msra.mxu0 %v402
    %449 = vmatprep.subr.mxu0 0.0
    %450 = vmatpush1.msra.mxu0 %v401
    %451 = vmatprep.subr.mxu0 0.0
    %452 = vmatpush1.msra.mxu0 %v400
    %453 = vmatprep.subr.mxu0 0.0
    %454 = vmatpush2.msra.mxu0 0.0
    %455 = vmatprep.subr.mxu0 0.0
    %456 = vmatpush2.msra.mxu0 0.0
    %457 = vmatprep.subr.mxu0 0.0
    %458 = vmatpush2.msra.mxu0 0.0
    %459 = vmatprep.subr.mxu0 0.0
    %460 = vmatpush2.msra.mxu0 0.0
    %461 = vmatprep.subr.mxu0 0.0
    %462 = vmatpush2.msra.mxu0 0.0
    %463 = vmatprep.subr.mxu0 0.0
    %464 = vmatpush2.msra.mxu0 0.0
    %465 = vmatprep.subr.mxu0 0.0
    %466 = vmatpush2.msra.mxu0 0.0
    %467 = vmatprep.subr.mxu0 0.0
    %468 = vmatpush2.msra.mxu0 0.0
    %469 = vmatprep.subr.mxu0 0.0
    %470 = vmatpush2.msra.mxu0 0.0
    %471 = vmatprep.subr.mxu0 0.0
    %472 = vmatpush2.msra.mxu0 0.0
    %473 = vmatprep.subr.mxu0 0.0
    %474 = vmatpush2.msra.mxu0 0.0
    %475 = vmatprep.subr.mxu0 0.0
    %476 = vmatpush2.msra.mxu0 0.0
    %477 = vmatprep.subr.mxu0 0.0
    %478 = vmatpush2.msra.mxu0 0.0
    %479 = vmatprep.subr.mxu0 0.0
    %480 = vmatpush2.msra.mxu0 0.0
    %481 = vmatprep.subr.mxu0 0.0
    %482 = vmatpush2.msra.mxu0 0.0
    %483 = vmatprep.subr.mxu0 0.0
    %484 = vmatpush2.msra.mxu0 0.0
    %485 = vmatprep.mubr.f32.mxu0 0.0
    %486 = vmatmul.mubr.f32.gmra.mxu0 %v399
    %v487 = vpop.f32.mrf.mxu0
    %v488 = vadd.f32 %v420, %v487
    %v489 = vpop.f32.mrf.mxu0
    %490 = vdwg.mxu0
    %v491 = vmax.f32 %v488, 0.0
    %v492 = vld [vmem:[#allocation11] sm:$0xff]
    %v493 = vld [vmem:[#allocation11 + $0x8] sm:$0xff]
    %v494 = vld [vmem:[#allocation11 + $0x10] sm:$0xff]
    %v495 = vld [vmem:[#allocation11 + $0x18] sm:$0xff]
    %v496 = vld [vmem:[#allocation11 + $0x20] sm:$0xff]
    %v497 = vld [vmem:[#allocation11 + $0x28] sm:$0xff]
    %v498 = vld [vmem:[#allocation11 + $0x30] sm:$0xff]
    %v499 = vld [vmem:[#allocation11 + $0x38] sm:$0xff]
    %v500 = vld [vmem:[#allocation11 + $0x40] sm:$0xff]
    %v501 = vld [vmem:[#allocation11 + $0x48] sm:$0xff]
    %v502 = vld [vmem:[#allocation11 + $0x50] sm:$0xff]
    %v503 = vld [vmem:[#allocation11 + $0x58] sm:$0xff]
    %v504 = vld [vmem:[#allocation11 + $0x60] sm:$0xff]
    %v505 = vld [vmem:[#allocation11 + $0x68] sm:$0xff]
    %v506 = vld [vmem:[#allocation11 + $0x70] sm:$0xff]
    %v507 = vld [vmem:[#allocation11 + $0x78] sm:$0xff]
    %v508 = vld [vmem:[%s6 + $0x4] sm:$0x1]
    %v509 = vlaneseq
    %v510 = vshrl.u32 %v509, 7
    %v511 = vsub.s32 0, %v510
    %v512 = vrot.slane %v508, %v511
    %513 = vmatprep.subr.mxu0 0.0
    %514 = vmatpush1.msra.mxu0 %v507
    %515 = vmatprep.subr.mxu0 0.0
    %516 = vmatpush1.msra.mxu0 %v506
    %517 = vmatprep.subr.mxu0 0.0
    %518 = vmatpush1.msra.mxu0 %v505
    %519 = vmatprep.subr.mxu0 0.0
    %520 = vmatpush1.msra.mxu0 %v504
    %521 = vmatprep.subr.mxu0 0.0
    %522 = vmatpush1.msra.mxu0 %v503
    %523 = vmatprep.subr.mxu0 0.0
    %524 = vmatpush1.msra.mxu0 %v502
    %525 = vmatprep.subr.mxu0 0.0
    %526 = vmatpush1.msra.mxu0 %v501
    %527 = vmatprep.subr.mxu0 0.0
    %528 = vmatpush1.msra.mxu0 %v500
    %529 = vmatprep.subr.mxu0 0.0
    %530 = vmatpush1.msra.mxu0 %v499
    %531 = vmatprep.subr.mxu0 0.0
    %532 = vmatpush1.msra.mxu0 %v498
    %533 = vmatprep.subr.mxu0 0.0
    %534 = vmatpush1.msra.mxu0 %v497
    %535 = vmatprep.subr.mxu0 0.0
    %536 = vmatpush1.msra.mxu0 %v496
    %537 = vmatprep.subr.mxu0 0.0
    %538 = vmatpush1.msra.mxu0 %v495
    %539 = vmatprep.subr.mxu0 0.0
    %540 = vmatpush1.msra.mxu0 %v494
    %541 = vmatprep.subr.mxu0 0.0
    %542 = vmatpush1.msra.mxu0 %v493
    %543 = vmatprep.subr.mxu0 0.0
    %544 = vmatpush1.msra.mxu0 %v492
    %545 = vmatprep.subr.mxu0 0.0
    %546 = vmatpush2.msra.mxu0 0.0
    %547 = vmatprep.subr.mxu0 0.0
    %548 = vmatpush2.msra.mxu0 0.0
    %549 = vmatprep.subr.mxu0 0.0
    %550 = vmatpush2.msra.mxu0 0.0
    %551 = vmatprep.subr.mxu0 0.0
    %552 = vmatpush2.msra.mxu0 0.0
    %553 = vmatprep.subr.mxu0 0.0
    %554 = vmatpush2.msra.mxu0 0.0
    %555 = vmatprep.subr.mxu0 0.0
    %556 = vmatpush2.msra.mxu0 0.0
    %557 = vmatprep.subr.mxu0 0.0
    %558 = vmatpush2.msra.mxu0 0.0
    %559 = vmatprep.subr.mxu0 0.0
    %560 = vmatpush2.msra.mxu0 0.0
    %561 = vmatprep.subr.mxu0 0.0
    %562 = vmatpush2.msra.mxu0 0.0
    %563 = vmatprep.subr.mxu0 0.0
    %564 = vmatpush2.msra.mxu0 0.0
    %565 = vmatprep.subr.mxu0 0.0
    %566 = vmatpush2.msra.mxu0 0.0
    %567 = vmatprep.subr.mxu0 0.0
    %568 = vmatpush2.msra.mxu0 0.0
    %569 = vmatprep.subr.mxu0 0.0
    %570 = vmatpush2.msra.mxu0 0.0
    %571 = vmatprep.subr.mxu0 0.0
    %572 = vmatpush2.msra.mxu0 0.0
    %573 = vmatprep.subr.mxu0 0.0
    %574 = vmatpush2.msra.mxu0 0.0
    %575 = vmatprep.subr.mxu0 0.0
    %576 = vmatpush2.msra.mxu0 0.0
    %577 = vmatprep.mubr.f32.mxu0 0.0
    %578 = vmatmul.mubr.f32.gmra.mxu0 %v491
    %v579 = vpop.f32.mrf.mxu0
    %v580 = vadd.f32 %v512, %v579
    %v581 = vpop.f32.mrf.mxu0
    %582 = vdwg.mxu0
    %583 = vst [vmem:[#allocation13] sm:$0xff] %v580
    // Predicated region
    $region54: #{tpu_custom_call.1} parent=1 // pred_check
      _
    $region55: #{tpu_custom_call.1} parent=1 // pred_check_branch
      %585 = sbr.rel (0) target = $region57
    $region56: #{tpu_custom_call.1} parent=1 // pred_region
      %s587 = ssub.s32 128, 128
      %588 = vsyncadd [#allocation4], %s587
      %s590 = sshll.u32 [#allocation13], 4
      %s591 = int_to_ptr.vmem [resolvable:$true] %s590
      %593 = dma.vmem_to_hbm [thread:$0]  %s591, 128, %s7, [#allocation4]
    $region57: #{tpu_custom_call.1} parent=1 // pred_fallthru
      _
    // Predicated region
    $region58: #{tpu_custom_call.1} parent=1 // pred_check
      _
    $region59: #{tpu_custom_call.1} parent=1 // pred_check_branch
      %595 = sbr.rel (0) target = $region61
    $region60: #{tpu_custom_call.1} parent=1 // pred_region
      %596 = dma.done [#allocation4], 128
    $region61: #{tpu_custom_call.1} parent=1 // pred_fallthru
      _
    %597 = vsyncpa [#allocation3], 1
    %598 = vsyncpa [#allocation6], 1
    %599 = vsyncpa [#allocation9], 1
    %600 = vsyncpa [#allocation12], 1
    %601 = vsyncpa [#allocation4], 1

</llo_original>
